<compile_context>
chip_gen: v7x
topology: tpu7x:2x2x1
jax: 0.10.0
libtpu: 0.0.40
codegen_flags: <defaults>
</compile_context>

<pallas_src>
import jax
import jax.numpy as jnp
from jax.experimental import pallas as pl
from jax.experimental.pallas import tpu as pltpu


def _output_block_kernel(x_ref, w_ref, b_ref, o_ref):
    """Fused 1x1 conv + bias + sigmoid on one lane tile.

    x: (N*Cin, TILE_HW)   w: (N*Cout, N*Cin) block-diagonal   b: (N*Cout, 1)
    o: (N*Cout, TILE_HW)
    """
    # One dense dot: the per-batch 1x1 convs are folded into a block-diagonal
    # matmul so both operands and the store are sublane-full.
    v = jnp.dot(w_ref[...], x_ref[...], preferred_element_type=jnp.float32)
    v = v + b_ref[...]                       # (N*Cout, 1) broadcasts over lanes, once.
    # sigmoid: exp on the EUP; exact reciprocal (approx=True would risk the
    # 1e-5 tolerance) also rides the EUP slot instead of a VPU divide chain.
    s = pl.reciprocal(1.0 + jnp.exp(-v), approx=False)
    o_ref[...] = s.astype(o_ref.dtype)


def _pick_hw_tile(hw, max_tile=4096):
    """Largest multiple-of-128 divisor of hw that is <= max_tile (else full hw)."""
    if hw <= max_tile or hw % 128 != 0:
        return hw
    t = max_tile - (max_tile % 128)
    while t >= 128:
        if hw % t == 0:
            return t
        t -= 128
    return hw


def output_block_forward(x_nchw, w, b):
    """PyTorch OutputBlock.forward: sigmoid(Conv2d(kernel_size=1)(x)).

    x_nchw: (N, Cin, H, W)   w: (Cout, Cin)   b: (Cout,)
    """
    N, Cin, H, W = x_nchw.shape
    Cout = w.shape[0]
    HW = H * W
    out_dtype = x_nchw.dtype

    # Contiguous reshapes only (no transpose/relayout): NCHW -> (N*Cin, H*W).
    x2 = x_nchw.reshape(N * Cin, HW)
    # Block-diagonal weight folds the batch loop into a single dot.
    w_bd = jnp.kron(jnp.eye(N, dtype=w.dtype), w)          # (N*Cout, N*Cin)
    b_bd = jnp.tile(b, N).reshape(N * Cout, 1)              # (N*Cout, 1)

    tile_hw = _pick_hw_tile(HW)
    grid = (HW // tile_hw,)

    out = pl.pallas_call(
        _output_block_kernel,
        out_shape=jax.ShapeDtypeStruct((N * Cout, HW), out_dtype),
        grid_spec=pltpu.PrefetchScalarGridSpec(
            num_scalar_prefetch=0,
            grid=grid,
            in_specs=[
                pl.BlockSpec((N * Cin, tile_hw), lambda j: (0, j)),
                pl.BlockSpec((N * Cout, N * Cin), lambda j: (0, 0)),   # resident
                pl.BlockSpec((N * Cout, 1), lambda j: (0, 0)),         # resident
            ],
            out_specs=pl.BlockSpec((N * Cout, tile_hw), lambda j: (0, j)),
        ),
        compiler_params=pltpu.CompilerParams(
            dimension_semantics=("parallel",),   # shards HW tiles across TCs on v7x
        ),
    )(x2, w_bd, b_bd)

    # Rows are ordered (n, cout) row-major -> contiguous reshape back to NCHW.
    return out.reshape(N, Cout, H, W)


# --------------------------------------------------------------------------
# Pure-JAX reference (validation only)
# --------------------------------------------------------------------------
def reference_output_block(x_nchw, w, b):
    out = jnp.einsum('oc,nchw->nohw', w, x_nchw) + b[None, :, None, None]
    return jax.nn.sigmoid(out)


if __name__ == "__main__":
    key = jax.random.PRNGKey(0)
    kx, kw, kb = jax.random.split(key, 3)

    in_channels, out_channels = 4, 4
    N, H, W = 2, 16, 16

    # Same layout/shapes as the PyTorch module: x is NCHW (2, 4, 16, 16).
    x = jax.random.normal(kx, (N, in_channels, H, W), jnp.float32)
    w = 0.3 * jax.random.normal(kw, (out_channels, in_channels), jnp.float32)
    b = 0.1 * jax.random.normal(kb, (out_channels,), jnp.float32)

    out = output_block_forward(x, w, b)
    out = jax.block_until_ready(out)

    ref = reference_output_block(x, w, b)
    assert out.shape == ref.shape == (N, out_channels, H, W), (out.shape, ref.shape)
    max_err = float(jnp.max(jnp.abs(out - ref)))
    assert jnp.allclose(out, ref, rtol=1e-5, atol=1e-5), max_err

    print("KERNEL_OK")
</pallas_src>

<mosaic_0001>
module attributes {stable_mosaic.version = 11 : i64} {
  func.func @_output_block_kernel(%arg0: i32, %arg1: memref<8x256xf32, #tpu.memory_space<vmem>>, %arg2: memref<8x8xf32, #tpu.memory_space<vmem>>, %arg3: memref<8x1xf32, #tpu.memory_space<vmem>>, %arg4: memref<8x256xf32, #tpu.memory_space<vmem>>) attributes {dimension_semantics = [#tpu.dimension_semantics<parallel>], iteration_bounds = array<i64: 1>, scalar_prefetch = 0 : i64, scratch_operands = 0 : i64, tpu.core_type = #tpu.core_type<tc>, window_params = [{transform_indices = @transform_0, window_bounds = array<i64: 8, 256>}, {pipeline_mode = #tpu.pipeline_mode<synchronous>, transform_indices = @transform_1, window_bounds = array<i64: 8, 8>}, {pipeline_mode = #tpu.pipeline_mode<synchronous>, transform_indices = @transform_2, window_bounds = array<i64: 8, 1>}, {transform_indices = @transform_3, window_bounds = array<i64: 8, 256>}]} {
    %c0 = arith.constant 0 : index
    %c0_0 = arith.constant 0 : index
    %0 = vector.load %arg2[%c0, %c0_0] : memref<8x8xf32, #tpu.memory_space<vmem>>, vector<8x8xf32>
    %c0_1 = arith.constant 0 : index
    %c0_2 = arith.constant 0 : index
    %1 = vector.load %arg1[%c0_1, %c0_2] : memref<8x256xf32, #tpu.memory_space<vmem>>, vector<8x256xf32>
    %cst = arith.constant dense<0.000000e+00> : vector<8x256xf32>
    %2 = tpu.matmul %0, %1, %cst {dimension_numbers = #tpu.dot_dimension_numbers<[1], [0], [0], [1], [0, 0, 1, 1], [], []>} : vector<8x8xf32>, vector<8x256xf32>, vector<8x256xf32> -> vector<8x256xf32>
    %c0_3 = arith.constant 0 : index
    %c0_4 = arith.constant 0 : index
    %3 = vector.load %arg3[%c0_3, %c0_4] : memref<8x1xf32, #tpu.memory_space<vmem>>, vector<8x1xf32>
    %4 = vector.broadcast %3 : vector<8x1xf32> to vector<8x256xf32>
    %5 = arith.addf %2, %4 : vector<8x256xf32>
    %cst_5 = arith.constant 0.000000e+00 : f32
    %6 = vector.broadcast %cst_5 : f32 to vector<8x256xf32>
    %7 = arith.subf %6, %5 : vector<8x256xf32>
    %8 = math.exp %7 : vector<8x256xf32>
    %cst_6 = arith.constant 1.000000e+00 : f32
    %9 = vector.broadcast %cst_6 : f32 to vector<8x256xf32>
    %10 = arith.addf %9, %8 : vector<8x256xf32>
    %11 = tpu.reciprocal %10 : vector<8x256xf32> -> vector<8x256xf32>
    %c0_7 = arith.constant 0 : index
    %c0_8 = arith.constant 0 : index
    %12 = vector.load %arg4[%c0_7, %c0_8] : memref<8x256xf32, #tpu.memory_space<vmem>>, vector<8x256xf32>
    tpu.vector_store %arg4[%c0_7, %c0_8], %11 {strides = array<i32>} : memref<8x256xf32, #tpu.memory_space<vmem>>, vector<8x256xf32>,
    return
  }
  func.func @transform_0(%arg0: i32) -> (i32, i32) {
    %c0_i32 = arith.constant 0 : i32
    %c0_i32_0 = arith.constant 0 : i32
    return %c0_i32, %arg0 : i32, i32
  }
  func.func @transform_1(%arg0: i32) -> (i32, i32) {
    %c0_i32 = arith.constant 0 : i32
    %c0_i32_0 = arith.constant 0 : i32
    %c0_i32_1 = arith.constant 0 : i32
    return %c0_i32, %c0_i32_0 : i32, i32
  }
  func.func @transform_2(%arg0: i32) -> (i32, i32) {
    %c0_i32 = arith.constant 0 : i32
    %c0_i32_0 = arith.constant 0 : i32
    %c0_i32_1 = arith.constant 0 : i32
    return %c0_i32, %c0_i32_0 : i32, i32
  }
  func.func @transform_3(%arg0: i32) -> (i32, i32) {
    %c0_i32 = arith.constant 0 : i32
    %c0_i32_0 = arith.constant 0 : i32
    return %c0_i32, %arg0 : i32, i32
  }
}

</mosaic_0001>

<llo_original>
// kernel: tpu_custom_call.1
$region0: #{tpu_custom_call.1}
  #allocation0 [shape = 'u32[]', space=smem, size = 0x4, offset = 0x4, fixed_abs, tag = 'smem constant byte address 0x4 - core index']
  #allocation1 [shape = 'u32[144,128]{1,0:T(1,128)}', space=vmem, size = 0x12000, scoped, tag = 'internal scratch']
  %s0 = inlined_call_operand.hbm [shape: f32[8,256], index: 0, kind: input, shape index: {}]
  %s1 = inlined_call_operand.vmem [shape: f32[8,8], index: 1, kind: input, shape index: {}]
  %s2 = inlined_call_operand.vmem [shape: f32[8,1], index: 2, kind: input, shape index: {}]
  %s3 = inlined_call_operand.hbm [shape: f32[8,256], index: 3, kind: output, shape index: {}]
  %s4 = sld [smem:[#allocation0]]
  $region26: #{tpu_custom_call.1} parent=0
    _
  %s6 = ssub.s32 1, %s4
  %s7 = scalar_select 0, %s6, %s4
  $region1: #{tpu_custom_call.1} parent=0
    #allocation2 [shape = 'u8[8192]{0}', space=vmem, size = 0x2000, scoped, tag = 'input window, operand 0, single buffered']
    #allocation3 [shape = 's32[1]{0}', space=sflag, size = 0x4, scoped, tag = 'scoped memory for tpu_custom_call.1']
    #allocation4 [shape = 's32[1]{0}', space=sflag, size = 0x4, scoped, tag = 'scoped memory for tpu_custom_call.1']
    #allocation5 [shape = 'u8[8192]{0}', space=vmem, size = 0x2000, scoped, tag = 'output window, operand 0, single buffered']
    %8 = vsyncpa [#allocation3], 0
    %9 = vsyncpa [#allocation4], 0
    // Predicated region
    $region2: #{tpu_custom_call.1} parent=1 // pred_check
      _
    $region3: #{tpu_custom_call.1} parent=1 // pred_check_branch
      %11 = sbr.rel (0) target = $region5
    $region4: #{tpu_custom_call.1} parent=1 // pred_region
      %s13 = ssub.s32 256, 256
      %14 = vsyncadd [#allocation3], %s13
      %s16 = sshll.u32 [#allocation2], 4
      %s17 = int_to_ptr.vmem [resolvable:$true] %s16
      %19 = dma.hbm_to_vmem [thread:$0]  %s0, 256, %s17, [#allocation3]
    $region5: #{tpu_custom_call.1} parent=1 // pred_fallthru
      _
    // Predicated region
    $region6: #{tpu_custom_call.1} parent=1 // pred_check
      _
    $region7: #{tpu_custom_call.1} parent=1 // pred_check_branch
      %21 = sbr.rel (0) target = $region9
    $region8: #{tpu_custom_call.1} parent=1 // pred_region
      _
    $region9: #{tpu_custom_call.1} parent=1 // pred_fallthru
      _
    // Predicated region
    $region10: #{tpu_custom_call.1} parent=1 // pred_check
      _
    $region11: #{tpu_custom_call.1} parent=1 // pred_check_branch
      %23 = sbr.rel (0) target = $region13
    $region12: #{tpu_custom_call.1} parent=1 // pred_region
      _
    $region13: #{tpu_custom_call.1} parent=1 // pred_fallthru
      _
    // Predicated region
    $region14: #{tpu_custom_call.1} parent=1 // pred_check
      _
    $region15: #{tpu_custom_call.1} parent=1 // pred_check_branch
      %25 = sbr.rel (0) target = $region17
    $region16: #{tpu_custom_call.1} parent=1 // pred_region
      %26 = dma.done [#allocation3], 256
    $region17: #{tpu_custom_call.1} parent=1 // pred_fallthru
      _
    %v27 = vld [vmem:[%s1] sm:$0xff]
    %v28 = vld [vmem:[#allocation2] sm:$0xff]
    %v29 = vld [vmem:[#allocation2 + $0x8] sm:$0xff]
    %v30 = vld [vmem:[%s2] sm:$0xff]
    %32 = vset.pattern.permute.xlu0 0
    %33 = vperm.xlu0 %32, %v30
    %v34 = vpop.permute.xlu0 %33
    %vm36 = vcmask 64512
    %v38 = vsel %vm36, %v27, 0
    %40 = vmatprep.subr.mxu0 %v29
    %41 = vmatpush1.msra.mxu0 %v28
    %42 = vmatprep.subr.mxu0 0.0
    %43 = vmatpush1.msra.mxu0 0.0
    %44 = vmatprep.subr.mxu0 0.0
    %45 = vmatpush1.msra.mxu0 0.0
    %46 = vmatprep.subr.mxu0 0.0
    %47 = vmatpush1.msra.mxu0 0.0
    %48 = vmatprep.subr.mxu0 0.0
    %49 = vmatpush1.msra.mxu0 0.0
    %50 = vmatprep.subr.mxu0 0.0
    %51 = vmatpush1.msra.mxu0 0.0
    %52 = vmatprep.subr.mxu0 0.0
    %53 = vmatpush1.msra.mxu0 0.0
    %54 = vmatprep.subr.mxu0 0.0
    %55 = vmatpush1.msra.mxu0 0.0
    %56 = vmatprep.subr.mxu0 0.0
    %57 = vmatpush1.msra.mxu0 0.0
    %58 = vmatprep.subr.mxu0 0.0
    %59 = vmatpush1.msra.mxu0 0.0
    %60 = vmatprep.subr.mxu0 0.0
    %61 = vmatpush1.msra.mxu0 0.0
    %62 = vmatprep.subr.mxu0 0.0
    %63 = vmatpush1.msra.mxu0 0.0
    %64 = vmatprep.subr.mxu0 0.0
    %65 = vmatpush1.msra.mxu0 0.0
    %66 = vmatprep.subr.mxu0 0.0
    %67 = vmatpush1.msra.mxu0 0.0
    %68 = vmatprep.subr.mxu0 0.0
    %69 = vmatpush1.msra.mxu0 0.0
    %70 = vmatprep.subr.mxu0 0.0
    %71 = vmatpush1.msra.mxu0 0.0
    %72 = vmatprep.subr.mxu0 0.0
    %73 = vmatpush1.msra.mxu0 0.0
    %74 = vmatprep.subr.mxu0 0.0
    %75 = vmatpush1.msra.mxu0 0.0
    %76 = vmatprep.subr.mxu0 0.0
    %77 = vmatpush1.msra.mxu0 0.0
    %78 = vmatprep.subr.mxu0 0.0
    %79 = vmatpush1.msra.mxu0 0.0
    %80 = vmatprep.subr.mxu0 0.0
    %81 = vmatpush1.msra.mxu0 0.0
    %82 = vmatprep.subr.mxu0 0.0
    %83 = vmatpush1.msra.mxu0 0.0
    %84 = vmatprep.subr.mxu0 0.0
    %85 = vmatpush1.msra.mxu0 0.0
    %86 = vmatprep.subr.mxu0 0.0
    %87 = vmatpush1.msra.mxu0 0.0
    %88 = vmatprep.subr.mxu0 0.0
    %89 = vmatpush1.msra.mxu0 0.0
    %90 = vmatprep.subr.mxu0 0.0
    %91 = vmatpush1.msra.mxu0 0.0
    %92 = vmatprep.subr.mxu0 0.0
    %93 = vmatpush1.msra.mxu0 0.0
    %94 = vmatprep.subr.mxu0 0.0
    %95 = vmatpush1.msra.mxu0 0.0
    %96 = vmatprep.subr.mxu0 0.0
    %97 = vmatpush1.msra.mxu0 0.0
    %98 = vmatprep.subr.mxu0 0.0
    %99 = vmatpush1.msra.mxu0 0.0
    %100 = vmatprep.subr.mxu0 0.0
    %101 = vmatpush1.msra.mxu0 0.0
    %102 = vmatprep.subr.mxu0 0.0
    %103 = vmatpush1.msra.mxu0 0.0
    %104 = vmatprep.mubr.f32.mxu0 0.0
    %105 = vmatmul.mubr.f32.gmra.mrb[0].mxu0 %v38
    %v106 = vpop.f32.mrb[0].mxu0
    %v107 = vadd.f32 %v34, %v106
    %v108 = vpop.f32.mrb[0].mxu0
    %v109 = vadd.f32 %v34, %v108
    %110 = vdwg.mxu0
    %v111 = vsub.f32 0.0, %v107
    %v112 = vsub.f32 0.0, %v109
    %v113 = vmul.f32 %v111, 1.442695
    %v114 = vpow.pop %v113
    %v115 = vmul.f32 %v112, 1.442695
    %v116 = vpow.pop %v115
    %v117 = vadd.f32 %v114, 1.0
    %v118 = vadd.f32 %v116, 1.0
    %v119 = vrcp.pop %v117
    %v120 = vrcp.pop %v118
    %121 = vst [vmem:[#allocation5] sm:$0xff] %v119
    %122 = vst [vmem:[#allocation5 + $0x8] sm:$0xff] %v120
    // Predicated region
    $region18: #{tpu_custom_call.1} parent=1 // pred_check
      _
    $region19: #{tpu_custom_call.1} parent=1 // pred_check_branch
      %124 = sbr.rel (0) target = $region21
    $region20: #{tpu_custom_call.1} parent=1 // pred_region
      %s126 = ssub.s32 256, 256
      %127 = vsyncadd [#allocation4], %s126
      %s129 = sshll.u32 [#allocation5], 4
      %s130 = int_to_ptr.vmem [resolvable:$true] %s129
      %132 = dma.vmem_to_hbm [thread:$0]  %s130, 256, %s3, [#allocation4]
    $region21: #{tpu_custom_call.1} parent=1 // pred_fallthru
      _
    // Predicated region
    $region22: #{tpu_custom_call.1} parent=1 // pred_check
      _
    $region23: #{tpu_custom_call.1} parent=1 // pred_check_branch
      %134 = sbr.rel (0) target = $region25
    $region24: #{tpu_custom_call.1} parent=1 // pred_region
      %135 = dma.done [#allocation4], 256
    $region25: #{tpu_custom_call.1} parent=1 // pred_fallthru
      _
    %136 = vsyncpa [#allocation3], 1
    %137 = vsyncpa [#allocation4], 1

</llo_original>
